<compile_context>
chip_gen: v7x
topology: tpu7x:2x2x1
jax: 0.10.0
libtpu: 0.0.40
codegen_flags: <defaults>
</compile_context>

<pallas_src>
import jax
import jax.numpy as jnp
from jax.experimental import pallas as pl
from jax.experimental.pallas import tpu as pltpu

_LANE = 128      # lane width (last dim granularity)
_SUBLANE = 8     # sublane width (second-to-last dim granularity, f32)


def _round_up(x, m):
    return ((x + m - 1) // m) * m


def _qnet_kernel(x_ref, w1_ref, b1_ref, w2_ref, b2_ref, w3_ref, b3_ref, o_ref):
    """Fused 3-layer MLP on one batch tile; weights stay resident in VMEM."""
    bf16 = jnp.bfloat16
    x = x_ref[...].astype(bf16)                                   # MXU bf16 operands
    h1 = jnp.dot(x, w1_ref[...], preferred_element_type=jnp.float32)
    h1 = jnp.maximum(h1 + b1_ref[...], 0.0)                       # f32 bias + ReLU
    h2 = jnp.dot(h1.astype(bf16), w2_ref[...], preferred_element_type=jnp.float32)
    h2 = jnp.maximum(h2 + b2_ref[...], 0.0)
    q = jnp.dot(h2.astype(bf16), w3_ref[...], preferred_element_type=jnp.float32)
    o_ref[...] = (q + b3_ref[...]).astype(o_ref.dtype)            # (TB, n_actions)


def prepare_params(w1, b1, w2, b2, w3, b3):
    """One-time (per parameter update) padding + cast of the QNetwork params.

    Weights are (in, out) (transposed vs torch.nn.Linear); biases are (1, out)
    or (out,).  Only the hidden dim is padded to 128 lanes; obs_dim and
    n_actions stay unpadded and use full-extent BlockSpec dims.
    """
    obs_dim, H = w1.shape
    n_actions = w3.shape[1]
    h_pad = _round_up(H, _LANE)
    bf16, f32 = jnp.bfloat16, jnp.float32

    w1p = jnp.zeros((obs_dim, h_pad), bf16).at[:, :H].set(w1.astype(bf16))
    b1p = jnp.zeros((1, h_pad), f32).at[:, :H].set(b1.reshape(1, -1).astype(f32))
    w2p = jnp.zeros((h_pad, h_pad), bf16).at[:H, :H].set(w2.astype(bf16))
    b2p = jnp.zeros((1, h_pad), f32).at[:, :H].set(b2.reshape(1, -1).astype(f32))
    w3p = jnp.zeros((h_pad, n_actions), bf16).at[:H, :].set(w3.astype(bf16))
    b3p = b3.reshape(1, -1).astype(f32)
    return (w1p, b1p, w2p, b2p, w3p, b3p)


def q_network_forward(x, prepared_params, *, max_batch_tile=2048):
    """Fused MLP forward. x: (B, obs_dim) -> Q-values (B, n_actions) in f32."""
    w1p, b1p, w2p, b2p, w3p, b3p = prepared_params
    B, obs_dim = x.shape
    assert w1p.shape[0] == obs_dim
    h_pad = w1p.shape[1]
    n_actions = w3p.shape[1]

    # Batch tile: multiple of 8 sublanes.  For small B, shrink so the grid has
    # >= 2 steps (v7x: each TensorCore gets at least one tile); cap at 2048 so
    # tiles amortize the ~0.35us/step pipeline overhead while staying tiny in
    # VMEM on all generations (incl. v7x's 64 MiB).
    tb = min(max_batch_tile, _round_up(max(-(-B // 2), 1), _SUBLANE))
    if tb >= B:
        tb = B            # single block; block dim == full array dim is legal
    grid = (pl.cdiv(B, tb),)   # ragged last block handled by Pallas

    def resident(shape):
        # Constant block index -> array pinned in VMEM across all grid steps.
        # TODO(synk): for large H (>=1024), add pipeline_mode=pl.Buffered(1) on
        # these specs and re-derive the VMEM budget against v7x's 64 MiB.
        return pl.BlockSpec(shape, lambda i: (0, 0))

    return pl.pallas_call(
        _qnet_kernel,
        out_shape=jax.ShapeDtypeStruct((B, n_actions), jnp.float32),
        grid=grid,
        in_specs=[
            pl.BlockSpec((tb, obs_dim), lambda i: (i, 0)),  # x: tiled over batch, unpadded
            resident((obs_dim, h_pad)),                     # w1 (bf16)
            resident((1, h_pad)),                           # b1 (f32)
            resident((h_pad, h_pad)),                       # w2 (bf16)
            resident((1, h_pad)),                           # b2 (f32)
            resident((h_pad, n_actions)),                   # w3 (bf16)
            resident((1, n_actions)),                       # b3 (f32)
        ],
        out_specs=pl.BlockSpec((tb, n_actions), lambda i: (i, 0)),
        compiler_params=pltpu.CompilerParams(
            dimension_semantics=("parallel",),  # v7x: shard batch tiles across 2 TCs
        ),
    )(x, w1p, b1p, w2p, b2p, w3p, b3p)


def init_params(key, obs_dim, n_hidden_units, n_actions):
    """Deterministic synthetic init (uniform, torch-Linear-like scale)."""
    ks = jax.random.split(key, 6)

    def linear(kw, kb, fan_in, fan_out):
        bound = 1.0 / jnp.sqrt(float(fan_in))
        w = jax.random.uniform(kw, (fan_in, fan_out), jnp.float32, -bound, bound)
        b = jax.random.uniform(kb, (1, fan_out), jnp.float32, -bound, bound)
        return w, b

    w1, b1 = linear(ks[0], ks[1], obs_dim, n_hidden_units)
    w2, b2 = linear(ks[2], ks[3], n_hidden_units, n_hidden_units)
    w3, b3 = linear(ks[4], ks[5], n_hidden_units, n_actions)
    return w1, b1, w2, b2, w3, b3


def _ref_forward(x, w1, b1, w2, b2, w3, b3):
    # Pure-JAX reference mirroring the kernel's bf16-operand / f32-accumulate path.
    bf16 = jnp.bfloat16
    h1 = jnp.maximum(
        jnp.dot(x.astype(bf16), w1.astype(bf16), preferred_element_type=jnp.float32) + b1, 0.0)
    h2 = jnp.maximum(
        jnp.dot(h1.astype(bf16), w2.astype(bf16), preferred_element_type=jnp.float32) + b2, 0.0)
    return jnp.dot(h2.astype(bf16), w3.astype(bf16), preferred_element_type=jnp.float32) + b3


if __name__ == "__main__":
    # Small shapes consistent with the module's forward:
    #   observations: (batch_size, obs_dim) -> q-values: (batch_size, n_actions)
    batch_size = 2
    obs_dim = 8
    n_hidden_units = 32
    n_actions = 4

    key = jax.random.PRNGKey(0)
    k_obs, k_params = jax.random.split(key)

    x = jax.random.normal(k_obs, (batch_size, obs_dim), jnp.float32)
    params = init_params(k_params, obs_dim, n_hidden_units, n_actions)

    prepared = prepare_params(*params)        # once per parameter update, not per call
    q_values = q_network_forward(x, prepared)
    q_values = jax.block_until_ready(q_values)

    ref = _ref_forward(x, *params)
    assert q_values.shape == (batch_size, n_actions)
    assert jnp.allclose(q_values, ref, atol=1e-3, rtol=1e-3), (
        float(jnp.max(jnp.abs(q_values - ref))))

    print("KERNEL_OK")
</pallas_src>

<mosaic_0001>
module attributes {stable_mosaic.version = 11 : i64} {
  func.func @_qnet_kernel(%arg0: i32, %arg1: memref<2x8xf32, #tpu.memory_space<vmem>>, %arg2: memref<8x128xbf16, #tpu.memory_space<vmem>>, %arg3: memref<1x128xf32, #tpu.memory_space<vmem>>, %arg4: memref<128x128xbf16, #tpu.memory_space<vmem>>, %arg5: memref<1x128xf32, #tpu.memory_space<vmem>>, %arg6: memref<128x4xbf16, #tpu.memory_space<vmem>>, %arg7: memref<1x4xf32, #tpu.memory_space<vmem>>, %arg8: memref<2x4xf32, #tpu.memory_space<vmem>>) attributes {dimension_semantics = [#tpu.dimension_semantics<parallel>], iteration_bounds = array<i64: 1>, scalar_prefetch = 0 : i64, scratch_operands = 0 : i64, tpu.core_type = #tpu.core_type<tc>, window_params = [{transform_indices = @transform_0, window_bounds = array<i64: 2, 8>}, {pipeline_mode = #tpu.pipeline_mode<synchronous>, transform_indices = @transform_1, window_bounds = array<i64: 8, 128>}, {pipeline_mode = #tpu.pipeline_mode<synchronous>, transform_indices = @transform_2, window_bounds = array<i64: 1, 128>}, {pipeline_mode = #tpu.pipeline_mode<synchronous>, transform_indices = @transform_3, window_bounds = array<i64: 128, 128>}, {pipeline_mode = #tpu.pipeline_mode<synchronous>, transform_indices = @transform_4, window_bounds = array<i64: 1, 128>}, {pipeline_mode = #tpu.pipeline_mode<synchronous>, transform_indices = @transform_5, window_bounds = array<i64: 128, 4>}, {pipeline_mode = #tpu.pipeline_mode<synchronous>, transform_indices = @transform_6, window_bounds = array<i64: 1, 4>}, {transform_indices = @transform_7, window_bounds = array<i64: 2, 4>}]} {
    %c0 = arith.constant 0 : index
    %c0_0 = arith.constant 0 : index
    %0 = vector.load %arg1[%c0, %c0_0] : memref<2x8xf32, #tpu.memory_space<vmem>>, vector<2x8xf32>
    %1 = arith.truncf %0 : vector<2x8xf32> to vector<2x8xbf16>
    %c0_1 = arith.constant 0 : index
    %c0_2 = arith.constant 0 : index
    %2 = vector.load %arg2[%c0_1, %c0_2] : memref<8x128xbf16, #tpu.memory_space<vmem>>, vector<8x128xbf16>
    %cst = arith.constant dense<0.000000e+00> : vector<2x128xf32>
    %3 = tpu.matmul %1, %2, %cst {dimension_numbers = #tpu.dot_dimension_numbers<[1], [0], [0], [1], [0, 0, 1, 1], [], []>} : vector<2x8xbf16>, vector<8x128xbf16>, vector<2x128xf32> -> vector<2x128xf32>
    %c0_3 = arith.constant 0 : index
    %c0_4 = arith.constant 0 : index
    %4 = vector.load %arg3[%c0_3, %c0_4] : memref<1x128xf32, #tpu.memory_space<vmem>>, vector<1x128xf32>
    %5 = vector.broadcast %4 : vector<1x128xf32> to vector<2x128xf32>
    %6 = arith.addf %3, %5 : vector<2x128xf32>
    %cst_5 = arith.constant 0.000000e+00 : f32
    %7 = vector.broadcast %cst_5 : f32 to vector<2x128xf32>
    %8 = arith.maximumf %6, %7 : vector<2x128xf32>
    %9 = arith.truncf %8 : vector<2x128xf32> to vector<2x128xbf16>
    %c0_6 = arith.constant 0 : index
    %c0_7 = arith.constant 0 : index
    %10 = vector.load %arg4[%c0_6, %c0_7] : memref<128x128xbf16, #tpu.memory_space<vmem>>, vector<128x128xbf16>
    %cst_8 = arith.constant dense<0.000000e+00> : vector<2x128xf32>
    %11 = tpu.matmul %9, %10, %cst_8 {dimension_numbers = #tpu.dot_dimension_numbers<[1], [0], [0], [1], [0, 0, 1, 1], [], []>} : vector<2x128xbf16>, vector<128x128xbf16>, vector<2x128xf32> -> vector<2x128xf32>
    %c0_9 = arith.constant 0 : index
    %c0_10 = arith.constant 0 : index
    %12 = vector.load %arg5[%c0_9, %c0_10] : memref<1x128xf32, #tpu.memory_space<vmem>>, vector<1x128xf32>
    %13 = vector.broadcast %12 : vector<1x128xf32> to vector<2x128xf32>
    %14 = arith.addf %11, %13 : vector<2x128xf32>
    %cst_11 = arith.constant 0.000000e+00 : f32
    %15 = vector.broadcast %cst_11 : f32 to vector<2x128xf32>
    %16 = arith.maximumf %14, %15 : vector<2x128xf32>
    %17 = arith.truncf %16 : vector<2x128xf32> to vector<2x128xbf16>
    %c0_12 = arith.constant 0 : index
    %c0_13 = arith.constant 0 : index
    %18 = vector.load %arg6[%c0_12, %c0_13] : memref<128x4xbf16, #tpu.memory_space<vmem>>, vector<128x4xbf16>
    %cst_14 = arith.constant dense<0.000000e+00> : vector<2x4xf32>
    %19 = tpu.matmul %17, %18, %cst_14 {dimension_numbers = #tpu.dot_dimension_numbers<[1], [0], [0], [1], [0, 0, 1, 1], [], []>} : vector<2x128xbf16>, vector<128x4xbf16>, vector<2x4xf32> -> vector<2x4xf32>
    %c0_15 = arith.constant 0 : index
    %c0_16 = arith.constant 0 : index
    %20 = vector.load %arg7[%c0_15, %c0_16] : memref<1x4xf32, #tpu.memory_space<vmem>>, vector<1x4xf32>
    %21 = vector.broadcast %20 : vector<1x4xf32> to vector<2x4xf32>
    %22 = arith.addf %19, %21 : vector<2x4xf32>
    %c0_17 = arith.constant 0 : index
    %c0_18 = arith.constant 0 : index
    %23 = vector.load %arg8[%c0_17, %c0_18] : memref<2x4xf32, #tpu.memory_space<vmem>>, vector<2x4xf32>
    tpu.vector_store %arg8[%c0_17, %c0_18], %22 {strides = array<i32>} : memref<2x4xf32, #tpu.memory_space<vmem>>, vector<2x4xf32>,
    return
  }
  func.func @transform_0(%arg0: i32) -> (i32, i32) {
    %c0_i32 = arith.constant 0 : i32
    %c0_i32_0 = arith.constant 0 : i32
    return %arg0, %c0_i32 : i32, i32
  }
  func.func @transform_1(%arg0: i32) -> (i32, i32) {
    %c0_i32 = arith.constant 0 : i32
    %c0_i32_0 = arith.constant 0 : i32
    %c0_i32_1 = arith.constant 0 : i32
    return %c0_i32, %c0_i32_0 : i32, i32
  }
  func.func @transform_2(%arg0: i32) -> (i32, i32) {
    %c0_i32 = arith.constant 0 : i32
    %c0_i32_0 = arith.constant 0 : i32
    %c0_i32_1 = arith.constant 0 : i32
    return %c0_i32, %c0_i32_0 : i32, i32
  }
  func.func @transform_3(%arg0: i32) -> (i32, i32) {
    %c0_i32 = arith.constant 0 : i32
    %c0_i32_0 = arith.constant 0 : i32
    %c0_i32_1 = arith.constant 0 : i32
    return %c0_i32, %c0_i32_0 : i32, i32
  }
  func.func @transform_4(%arg0: i32) -> (i32, i32) {
    %c0_i32 = arith.constant 0 : i32
    %c0_i32_0 = arith.constant 0 : i32
    %c0_i32_1 = arith.constant 0 : i32
    return %c0_i32, %c0_i32_0 : i32, i32
  }
  func.func @transform_5(%arg0: i32) -> (i32, i32) {
    %c0_i32 = arith.constant 0 : i32
    %c0_i32_0 = arith.constant 0 : i32
    %c0_i32_1 = arith.constant 0 : i32
    return %c0_i32, %c0_i32_0 : i32, i32
  }
  func.func @transform_6(%arg0: i32) -> (i32, i32) {
    %c0_i32 = arith.constant 0 : i32
    %c0_i32_0 = arith.constant 0 : i32
    %c0_i32_1 = arith.constant 0 : i32
    return %c0_i32, %c0_i32_0 : i32, i32
  }
  func.func @transform_7(%arg0: i32) -> (i32, i32) {
    %c0_i32 = arith.constant 0 : i32
    %c0_i32_0 = arith.constant 0 : i32
    return %arg0, %c0_i32 : i32, i32
  }
}

</mosaic_0001>

<llo_original>
// kernel: tpu_custom_call.1
$region0: #{tpu_custom_call.1}
  #allocation0 [shape = 'u32[]', space=smem, size = 0x4, offset = 0x4, fixed_abs, tag = 'smem constant byte address 0x4 - core index']
  #allocation1 [shape = 'u32[144,128]{1,0:T(1,128)}', space=vmem, size = 0x12000, scoped, tag = 'internal scratch']
  %s0 = inlined_call_operand.vmem [shape: f32[2,8], index: 0, kind: input, shape index: {}]
  %s1 = inlined_call_operand.vmem [shape: bf16[8,128], index: 1, kind: input, shape index: {}]
  %s2 = inlined_call_operand.vmem [shape: f32[1,128], index: 2, kind: input, shape index: {}]
  %s3 = inlined_call_operand.vmem [shape: bf16[128,128], index: 3, kind: input, shape index: {}]
  %s4 = inlined_call_operand.vmem [shape: f32[1,128], index: 4, kind: input, shape index: {}]
  %s5 = inlined_call_operand.vmem [shape: bf16[128,4], index: 5, kind: input, shape index: {}]
  %s6 = inlined_call_operand.vmem [shape: f32[1,4], index: 6, kind: input, shape index: {}]
  %s7 = inlined_call_operand.hbm [shape: f32[2,4], index: 7, kind: output, shape index: {}]
  %s8 = sld [smem:[#allocation0]]
  $region38: #{tpu_custom_call.1} parent=0
    _
  %s10 = ssub.s32 1, %s8
  %s11 = scalar_select 0, %s10, %s8
  $region1: #{tpu_custom_call.1} parent=0
    #allocation2 [shape = 'u8[1024]{0}', space=vmem, size = 0x400, scoped, tag = 'output window, operand 0, single buffered']
    #allocation3 [shape = 's32[1]{0}', space=sflag, size = 0x4, scoped, tag = 'scoped memory for tpu_custom_call.1']
    %12 = vsyncpa [#allocation3], 0
    // Predicated region
    $region2: #{tpu_custom_call.1} parent=1 // pred_check
      _
    $region3: #{tpu_custom_call.1} parent=1 // pred_check_branch
      %14 = sbr.rel (0) target = $region5
    $region4: #{tpu_custom_call.1} parent=1 // pred_region
      _
    $region5: #{tpu_custom_call.1} parent=1 // pred_fallthru
      _
    // Predicated region
    $region6: #{tpu_custom_call.1} parent=1 // pred_check
      _
    $region7: #{tpu_custom_call.1} parent=1 // pred_check_branch
      %16 = sbr.rel (0) target = $region9
    $region8: #{tpu_custom_call.1} parent=1 // pred_region
      _
    $region9: #{tpu_custom_call.1} parent=1 // pred_fallthru
      _
    // Predicated region
    $region10: #{tpu_custom_call.1} parent=1 // pred_check
      _
    $region11: #{tpu_custom_call.1} parent=1 // pred_check_branch
      %18 = sbr.rel (0) target = $region13
    $region12: #{tpu_custom_call.1} parent=1 // pred_region
      _
    $region13: #{tpu_custom_call.1} parent=1 // pred_fallthru
      _
    // Predicated region
    $region14: #{tpu_custom_call.1} parent=1 // pred_check
      _
    $region15: #{tpu_custom_call.1} parent=1 // pred_check_branch
      %20 = sbr.rel (0) target = $region17
    $region16: #{tpu_custom_call.1} parent=1 // pred_region
      _
    $region17: #{tpu_custom_call.1} parent=1 // pred_fallthru
      _
    // Predicated region
    $region18: #{tpu_custom_call.1} parent=1 // pred_check
      _
    $region19: #{tpu_custom_call.1} parent=1 // pred_check_branch
      %22 = sbr.rel (0) target = $region21
    $region20: #{tpu_custom_call.1} parent=1 // pred_region
      _
    $region21: #{tpu_custom_call.1} parent=1 // pred_fallthru
      _
    // Predicated region
    $region22: #{tpu_custom_call.1} parent=1 // pred_check
      _
    $region23: #{tpu_custom_call.1} parent=1 // pred_check_branch
      %24 = sbr.rel (0) target = $region25
    $region24: #{tpu_custom_call.1} parent=1 // pred_region
      _
    $region25: #{tpu_custom_call.1} parent=1 // pred_fallthru
      _
    // Predicated region
    $region26: #{tpu_custom_call.1} parent=1 // pred_check
      _
    $region27: #{tpu_custom_call.1} parent=1 // pred_check_branch
      %26 = sbr.rel (0) target = $region29
    $region28: #{tpu_custom_call.1} parent=1 // pred_region
      _
    $region29: #{tpu_custom_call.1} parent=1 // pred_fallthru
      _
    %v28 = vld [vmem:[%s0] sm:$0x3]
    %v29 = vpack.c.bf16 %v28, %v28
    %v30 = vld [vmem:[%s1] sm:$0xf]
    %v31 = vld [vmem:[%s2] sm:$0x1]
    %v33 = vlaneseq
    %v34 = vshrl.u32 %v33, 7
    %v35 = vsub.s32 0, %v34
    %v36 = vrot.slane %v31, %v35
    %vm38 = vcmask 64512
    %v40 = vsel %vm38, %v29, 0
    %vm42 = vcmask 1043456
    %v44 = vsel %vm42, %v30, 0
    %46 = vmatprep.subr.bf16.mxu0 0
    %47 = vmatpush1.bf16.msra.mxu0 %v44
    %48 = vmatprep.subr.bf16.mxu0 0
    %49 = vmatpush1.bf16.msra.mxu0 0
    %50 = vmatprep.subr.bf16.mxu0 0
    %51 = vmatpush1.bf16.msra.mxu0 0
    %52 = vmatprep.subr.bf16.mxu0 0
    %53 = vmatpush1.bf16.msra.mxu0 0
    %54 = vmatprep.subr.bf16.mxu0 0
    %55 = vmatpush1.bf16.msra.mxu0 0
    %56 = vmatprep.subr.bf16.mxu0 0
    %57 = vmatpush1.bf16.msra.mxu0 0
    %58 = vmatprep.subr.bf16.mxu0 0
    %59 = vmatpush1.bf16.msra.mxu0 0
    %60 = vmatprep.subr.bf16.mxu0 0
    %61 = vmatpush1.bf16.msra.mxu0 0
    %62 = vmatprep.subr.bf16.mxu0 0
    %63 = vmatpush1.bf16.msra.mxu0 0
    %64 = vmatprep.subr.bf16.mxu0 0
    %65 = vmatpush1.bf16.msra.mxu0 0
    %66 = vmatprep.subr.bf16.mxu0 0
    %67 = vmatpush1.bf16.msra.mxu0 0
    %68 = vmatprep.subr.bf16.mxu0 0
    %69 = vmatpush1.bf16.msra.mxu0 0
    %70 = vmatprep.subr.bf16.mxu0 0
    %71 = vmatpush1.bf16.msra.mxu0 0
    %72 = vmatprep.subr.bf16.mxu0 0
    %73 = vmatpush1.bf16.msra.mxu0 0
    %74 = vmatprep.subr.bf16.mxu0 0
    %75 = vmatpush1.bf16.msra.mxu0 0
    %76 = vmatprep.subr.bf16.mxu0 0
    %77 = vmatpush1.bf16.msra.mxu0 0
    %78 = vmatprep.mubr.bf16.mxu0 0
    %79 = vmatmul.mubr.bf16.gmra.mrb[0].mxu0 %v40
    %v80 = vpop.f32.mrb[0].mxu0
    %v81 = vadd.f32 %v36, %v80
    %v82 = vpop.f32.mrb[0].mxu0
    %v83 = vpop.f32.mrb[0].mxu0
    %v84 = vpop.f32.mrb[0].mxu0
    %85 = vdwg.mxu0
    %v86 = vmax.f32 %v81, 0.0
    %v87 = vpack.c.bf16 %v86, %v86
    %v88 = vld [vmem:[%s3] sm:$0xf]
    %v89 = vld [vmem:[%s3 + $0x4] sm:$0xf]
    %v90 = vld [vmem:[%s3 + $0x8] sm:$0xf]
    %v91 = vld [vmem:[%s3 + $0xc] sm:$0xf]
    %v92 = vld [vmem:[%s3 + $0x10] sm:$0xf]
    %v93 = vld [vmem:[%s3 + $0x14] sm:$0xf]
    %v94 = vld [vmem:[%s3 + $0x18] sm:$0xf]
    %v95 = vld [vmem:[%s3 + $0x1c] sm:$0xf]
    %v96 = vld [vmem:[%s3 + $0x20] sm:$0xf]
    %v97 = vld [vmem:[%s3 + $0x24] sm:$0xf]
    %v98 = vld [vmem:[%s3 + $0x28] sm:$0xf]
    %v99 = vld [vmem:[%s3 + $0x2c] sm:$0xf]
    %v100 = vld [vmem:[%s3 + $0x30] sm:$0xf]
    %v101 = vld [vmem:[%s3 + $0x34] sm:$0xf]
    %v102 = vld [vmem:[%s3 + $0x38] sm:$0xf]
    %v103 = vld [vmem:[%s3 + $0x3c] sm:$0xf]
    %v104 = vld [vmem:[%s4] sm:$0x1]
    %v106 = vlaneseq
    %v107 = vshrl.u32 %v106, 7
    %v108 = vsub.s32 0, %v107
    %v109 = vrot.slane %v104, %v108
    %v127 = vunpack.c.l.b16 %v88
    %v128 = vunpack.c.l.b16 %v89
    %v129 = vunpack.c.l.b16 %v90
    %v130 = vunpack.c.l.b16 %v91
    %v131 = vunpack.c.l.b16 %v92
    %v132 = vunpack.c.l.b16 %v93
    %v133 = vunpack.c.l.b16 %v94
    %v134 = vunpack.c.l.b16 %v95
    %v135 = vunpack.c.l.b16 %v96
    %v136 = vunpack.c.l.b16 %v97
    %v137 = vunpack.c.l.b16 %v98
    %v138 = vunpack.c.l.b16 %v99
    %v139 = vunpack.c.l.b16 %v100
    %v140 = vunpack.c.l.b16 %v101
    %v141 = vunpack.c.l.b16 %v102
    %v142 = vunpack.c.l.b16 %v103
    %v143 = vpack.c.b16 %v128, %v127
    %v144 = vpack.c.b16 %v130, %v129
    %v145 = vpack.c.b16 %v132, %v131
    %v146 = vpack.c.b16 %v134, %v133
    %v147 = vpack.c.b16 %v136, %v135
    %v148 = vpack.c.b16 %v138, %v137
    %v149 = vpack.c.b16 %v140, %v139
    %v150 = vpack.c.b16 %v142, %v141
    %159 = vmatprep.subr.bf16.mxu0 0
    %160 = vmatpush1.bf16.msra.mxu0 %v143
    %161 = vmatprep.subr.bf16.mxu0 0
    %162 = vmatpush1.bf16.msra.mxu0 %v144
    %163 = vmatprep.subr.bf16.mxu0 0
    %164 = vmatpush1.bf16.msra.mxu0 %v145
    %165 = vmatprep.subr.bf16.mxu0 0
    %166 = vmatpush1.bf16.msra.mxu0 %v146
    %167 = vmatprep.subr.bf16.mxu0 0
    %168 = vmatpush1.bf16.msra.mxu0 %v147
    %169 = vmatprep.subr.bf16.mxu0 0
    %170 = vmatpush1.bf16.msra.mxu0 %v148
    %171 = vmatprep.subr.bf16.mxu0 0
    %172 = vmatpush1.bf16.msra.mxu0 %v149
    %173 = vmatprep.subr.bf16.mxu0 0
    %174 = vmatpush1.bf16.msra.mxu0 %v150
    %175 = vmatprep.subr.bf16.mxu0 0
    %176 = vmatpush1.bf16.msra.mxu0 0
    %177 = vmatprep.subr.bf16.mxu0 0
    %178 = vmatpush1.bf16.msra.mxu0 0
    %179 = vmatprep.subr.bf16.mxu0 0
    %180 = vmatpush1.bf16.msra.mxu0 0
    %181 = vmatprep.subr.bf16.mxu0 0
    %182 = vmatpush1.bf16.msra.mxu0 0
    %183 = vmatprep.subr.bf16.mxu0 0
    %184 = vmatpush1.bf16.msra.mxu0 0
    %185 = vmatprep.subr.bf16.mxu0 0
    %186 = vmatpush1.bf16.msra.mxu0 0
    %187 = vmatprep.subr.bf16.mxu0 0
    %188 = vmatpush1.bf16.msra.mxu0 0
    %189 = vmatprep.subr.bf16.mxu0 0
    %190 = vmatpush1.bf16.msra.mxu0 0
    %191 = vmatprep.mubr.bf16.mxu0 0
    %192 = vmatmul.mubr.bf16.gmra.mrb[0].mxu0 %v87
    %v193 = vpop.f32.mrb[0].mxu0
    %v194 = vadd.f32 %v109, %v193
    %v195 = vpop.f32.mrb[0].mxu0
    %v196 = vpop.f32.mrb[0].mxu0
    %v197 = vpop.f32.mrb[0].mxu0
    %198 = vdwg.mxu0
    %v199 = vmax.f32 %v194, 0.0
    %v200 = vpack.c.bf16 %v199, %v199
    %v201 = vld [vmem:[%s5] sm:$0xf]
    %v202 = vld [vmem:[%s5 + $0x4] sm:$0xf]
    %v203 = vld [vmem:[%s5 + $0x8] sm:$0xf]
    %v204 = vld [vmem:[%s5 + $0xc] sm:$0xf]
    %v205 = vld [vmem:[%s5 + $0x10] sm:$0xf]
    %v206 = vld [vmem:[%s5 + $0x14] sm:$0xf]
    %v207 = vld [vmem:[%s5 + $0x18] sm:$0xf]
    %v208 = vld [vmem:[%s5 + $0x1c] sm:$0xf]
    %v209 = vld [vmem:[%s5 + $0x20] sm:$0xf]
    %v210 = vld [vmem:[%s5 + $0x24] sm:$0xf]
    %v211 = vld [vmem:[%s5 + $0x28] sm:$0xf]
    %v212 = vld [vmem:[%s5 + $0x2c] sm:$0xf]
    %v213 = vld [vmem:[%s5 + $0x30] sm:$0xf]
    %v214 = vld [vmem:[%s5 + $0x34] sm:$0xf]
    %v215 = vld [vmem:[%s5 + $0x38] sm:$0xf]
    %v216 = vld [vmem:[%s5 + $0x3c] sm:$0xf]
    %v217 = vld [vmem:[%s6] sm:$0x1]
    %v219 = vlaneseq
    %v220 = vshrl.u32 %v219, 7
    %v221 = vsub.s32 0, %v220
    %v222 = vrot.slane %v217, %v221
    %v240 = vunpack.c.l.b16 %v201
    %v241 = vunpack.c.l.b16 %v202
    %v242 = vunpack.c.l.b16 %v203
    %v243 = vunpack.c.l.b16 %v204
    %v244 = vunpack.c.l.b16 %v205
    %v245 = vunpack.c.l.b16 %v206
    %v246 = vunpack.c.l.b16 %v207
    %v247 = vunpack.c.l.b16 %v208
    %v248 = vunpack.c.l.b16 %v209
    %v249 = vunpack.c.l.b16 %v210
    %v250 = vunpack.c.l.b16 %v211
    %v251 = vunpack.c.l.b16 %v212
    %v252 = vunpack.c.l.b16 %v213
    %v253 = vunpack.c.l.b16 %v214
    %v254 = vunpack.c.l.b16 %v215
    %v255 = vunpack.c.l.b16 %v216
    %v256 = vpack.c.b16 %v241, %v240
    %v257 = vpack.c.b16 %v243, %v242
    %v258 = vpack.c.b16 %v245, %v244
    %v259 = vpack.c.b16 %v247, %v246
    %v260 = vpack.c.b16 %v249, %v248
    %v261 = vpack.c.b16 %v251, %v250
    %v262 = vpack.c.b16 %v253, %v252
    %v263 = vpack.c.b16 %v255, %v254
    %272 = vmatprep.subr.bf16.mxu0 0
    %273 = vmatpush1.bf16.msra.mxu0 %v256
    %274 = vmatprep.subr.bf16.mxu0 0
    %275 = vmatpush1.bf16.msra.mxu0 %v257
    %276 = vmatprep.subr.bf16.mxu0 0
    %277 = vmatpush1.bf16.msra.mxu0 %v258
    %278 = vmatprep.subr.bf16.mxu0 0
    %279 = vmatpush1.bf16.msra.mxu0 %v259
    %280 = vmatprep.subr.bf16.mxu0 0
    %281 = vmatpush1.bf16.msra.mxu0 %v260
    %282 = vmatprep.subr.bf16.mxu0 0
    %283 = vmatpush1.bf16.msra.mxu0 %v261
    %284 = vmatprep.subr.bf16.mxu0 0
    %285 = vmatpush1.bf16.msra.mxu0 %v262
    %286 = vmatprep.subr.bf16.mxu0 0
    %287 = vmatpush1.bf16.msra.mxu0 %v263
    %288 = vmatprep.subr.bf16.mxu0 0
    %289 = vmatpush1.bf16.msra.mxu0 0
    %290 = vmatprep.subr.bf16.mxu0 0
    %291 = vmatpush1.bf16.msra.mxu0 0
    %292 = vmatprep.subr.bf16.mxu0 0
    %293 = vmatpush1.bf16.msra.mxu0 0
    %294 = vmatprep.subr.bf16.mxu0 0
    %295 = vmatpush1.bf16.msra.mxu0 0
    %296 = vmatprep.subr.bf16.mxu0 0
    %297 = vmatpush1.bf16.msra.mxu0 0
    %298 = vmatprep.subr.bf16.mxu0 0
    %299 = vmatpush1.bf16.msra.mxu0 0
    %300 = vmatprep.subr.bf16.mxu0 0
    %301 = vmatpush1.bf16.msra.mxu0 0
    %302 = vmatprep.subr.bf16.mxu0 0
    %303 = vmatpush1.bf16.msra.mxu0 0
    %304 = vmatprep.mubr.bf16.mxu0 0
    %305 = vmatmul.mubr.bf16.gmra.mrb[0].mxu0 %v200
    %v306 = vpop.f32.mrb[0].mxu0
    %v307 = vadd.f32 %v222, %v306
    %v308 = vpop.f32.mrb[0].mxu0
    %v309 = vpop.f32.mrb[0].mxu0
    %v310 = vpop.f32.mrb[0].mxu0
    %311 = vdwg.mxu0
    %vm312 = vcmask 25600
    %313 = vst.msk [vmem:[#allocation2] sm:$0x3] %vm312, %v307
    // Predicated region
    $region30: #{tpu_custom_call.1} parent=1 // pred_check
      _
    $region31: #{tpu_custom_call.1} parent=1 // pred_check_branch
      %315 = sbr.rel (0) target = $region33
    $region32: #{tpu_custom_call.1} parent=1 // pred_region
      %s317 = ssub.s32 32, 32
      %318 = vsyncadd [#allocation3], %s317
      %s320 = sshll.u32 [#allocation2], 4
      %s321 = int_to_ptr.vmem [resolvable:$true] %s320
      %323 = dma.vmem_to_hbm [thread:$0]  %s321, 32, %s7, [#allocation3]
    $region33: #{tpu_custom_call.1} parent=1 // pred_fallthru
      _
    // Predicated region
    $region34: #{tpu_custom_call.1} parent=1 // pred_check
      _
    $region35: #{tpu_custom_call.1} parent=1 // pred_check_branch
      %325 = sbr.rel (0) target = $region37
    $region36: #{tpu_custom_call.1} parent=1 // pred_region
      %326 = dma.done [#allocation3], 32
    $region37: #{tpu_custom_call.1} parent=1 // pred_fallthru
      _
    %327 = vsyncpa [#allocation3], 1

</llo_original>
